<compile_context>
chip_gen: v6e
topology: v6e:2x2x1
jax: 0.10.0
libtpu: 0.0.40
codegen_flags: <defaults>
</compile_context>

<pallas_src>
import functools

import jax
import jax.numpy as jnp
from jax import lax
from jax.experimental import pallas as pl
from jax.experimental.pallas import tpu as pltpu


def _round_up(x, m):
    return ((x + m - 1) // m) * m


def _sdpa_kernel(q_ref, k_ref, v_ref, *out_refs, inv_scale, with_attn,
                 total_q, total_b, group, q_ragged, b_ragged):
    q = q_ref[...]        # (G, tq, D)  native dtype
    k = k_ref[...]        # (G, Nk, D)
    v = v_ref[...]        # (G, Nk, D)

    # Fold 1/scale into the small q tile instead of the (tq, Nk) score matrix.
    qs = q * inv_scale

    # u = (q/scale) @ k^T, batched over the group dim, fp32 accumulation (MXU).
    u = lax.dot_general(
        qs, k,
        dimension_numbers=(((2,), (2,)), ((0,), (0,))),
        preferred_element_type=jnp.float32,
    )  # (G, tq, Nk) f32

    # Neutralize rows of ragged last blocks so exp() never sees undefined data
    # (those rows are discarded on writeback anyway).
    if q_ragged or b_ragged:
        valid = None
        if q_ragged:
            row = (pl.program_id(1) * u.shape[1]
                   + lax.broadcasted_iota(jnp.int32, u.shape, 1))
            valid = row < total_q
        if b_ragged:
            grp = (pl.program_id(0) * group
                   + lax.broadcasted_iota(jnp.int32, u.shape, 0))
            bvalid = grp < total_b
            valid = bvalid if valid is None else jnp.logical_and(valid, bvalid)
        u = jnp.where(valid, u, 0.0)

    # Numerically stable softmax over the key axis (torch dim=2).
    u_max = jnp.max(u, axis=-1, keepdims=True)
    e = jnp.exp(u - u_max)
    denom = jnp.sum(e, axis=-1, keepdims=True)
    attn = e * pl.reciprocal(denom)   # exact reciprocal: rows sum to 1

    if with_attn:
        attn_ref, out_ref = out_refs
        # Write attn before the second matmul so its writeback DMA overlaps it.
        attn_ref[...] = attn.astype(attn_ref.dtype)
    else:
        (out_ref,) = out_refs

    # output = 0.2 * (attn @ v) + 0.8 * q   (fp32 accumulate)
    av = lax.dot_general(
        attn.astype(v.dtype), v,
        dimension_numbers=(((2,), (1,)), ((0,), (0,))),
        preferred_element_type=jnp.float32,
    )  # (G, tq, D) f32
    out_ref[...] = (0.2 * av + 0.8 * q.astype(jnp.float32)).astype(out_ref.dtype)


def scaled_dot_product_attention_batched(q, k, v, scale, mask=None, *,
                                         return_attn=True, attn_dtype=None):
    """Batch of independent SDPAs fused into one pallas_call.

    q: (B, Nq, D), k/v: (B, Nk, D).
    Returns (attn, out): attn (B, Nq, Nk) (or None if return_attn=False),
    out (B, Nq, D).
    """
    # TODO(synk): masked_fill(mask, -inf) path not implemented (mask=None in Open3DIS).
    assert mask is None
    B, Nq, D = q.shape
    Bk, Nk, Dk = k.shape
    assert (Bk, Dk) == (B, D) and v.shape == (B, Nk, D)

    attn_dtype = q.dtype if attn_dtype is None else jnp.dtype(attn_dtype)
    esize = jnp.dtype(q.dtype).itemsize
    attn_esize = jnp.dtype(attn_dtype).itemsize

    # ---- VMEM-aware tile sizing (safe on v5e/v6e/v7x default scoped limits) --
    budget = 20 * 1024 * 1024

    def working_set(g, tq):
        qb = 2 * g * tq * D * esize                       # q, double buffered
        ob = 2 * g * tq * D * esize                       # out
        ab = (2 * g * tq * Nk * attn_esize) if return_attn else 0
        kb = 2 * 2 * g * Nk * D * esize                   # k + v (conservative)
        return qb + ob + ab + kb

    # Query tile: biggest that fits, but >= 2 blocks on mid/large Nq so the
    # parallel grid axis can shard across v7x's two TensorCores.
    if Nq > 512:
        tq = 512
    elif Nq > 256 or (Nq >= 128 and B == 1):
        tq = _round_up(-(-Nq // 2), 8)
    else:
        tq = Nq
    while tq > 8 and working_set(1, tq) > budget:
        tq = max(8, _round_up(tq // 2, 8))

    # Batch-group size: fold several independent SDPAs into one grid step to
    # amortize per-step overhead, bounded by the VMEM budget.
    cap = max(1, 2048 // max(tq, 1))
    G = min(B, cap)
    while G > 1 and working_set(G, tq) > budget:
        G = (G + 1) // 2

    nbg = -(-B // G)
    nqb = -(-Nq // tq)

    # k/v are constant across the inner (query) axis; if there is a single
    # batch group they never change -> single-buffer them (halves their VMEM).
    kv_kwargs = dict(pipeline_mode=pl.Buffered(1)) if nbg == 1 else {}

    kernel = functools.partial(
        _sdpa_kernel,
        inv_scale=1.0 / float(scale),
        with_attn=return_attn,
        total_q=Nq, total_b=B, group=G,
        q_ragged=(Nq % tq != 0), b_ragged=(B % G != 0),
    )

    out_shape = jax.ShapeDtypeStruct((B, Nq, D), q.dtype)
    out_specs = pl.BlockSpec((G, tq, D), lambda b, i: (b, i, 0))
    if return_attn:
        out_shape = (jax.ShapeDtypeStruct((B, Nq, Nk), attn_dtype), out_shape)
        out_specs = (pl.BlockSpec((G, tq, Nk), lambda b, i: (b, i, 0)), out_specs)

    io_bytes = (2 * B * Nq * D + 2 * B * Nk * D) * esize
    if return_attn:
        io_bytes += B * Nq * Nk * attn_esize

    # TODO(synk): for sub-128 Nk/D a lane-dense packed attn/out layout (heads
    # side-by-side in the lane dim + wrapper reshape) would avoid masked stores.
    result = pl.pallas_call(
        kernel,
        out_shape=out_shape,
        grid=(nbg, nqb),
        in_specs=[
            pl.BlockSpec((G, tq, D), lambda b, i: (b, i, 0)),                # q
            pl.BlockSpec((G, Nk, D), lambda b, i: (b, 0, 0), **kv_kwargs),   # k
            pl.BlockSpec((G, Nk, D), lambda b, i: (b, 0, 0), **kv_kwargs),   # v
        ],
        out_specs=out_specs,
        compiler_params=pltpu.CompilerParams(
            dimension_semantics=("parallel", "parallel"),
            vmem_limit_bytes=32 * 1024 * 1024,
        ),
        cost_estimate=pl.CostEstimate(
            flops=4 * B * Nq * Nk * D,
            transcendentals=B * Nq * Nk,
            bytes_accessed=io_bytes,
        ),
    )(q, k, v)

    if return_attn:
        attn, out = result
    else:
        attn, out = None, result
    return attn, out


def scaled_dot_product_attention(q, k, v, scale, mask=None):
    """Pallas equivalent of ScaledDotProductAttention.forward (mask=None path).

    q: (Nq, D), k/v: (Nk, D). Returns (attn, output) with attn: (1, Nq, Nk)
    and output: (Nq, D), matching the torch unsqueeze/squeeze behaviour.
    """
    attn, out = scaled_dot_product_attention_batched(
        q[None], k[None], v[None], scale, mask)
    return attn, out[0]


# ----------------------------- reference / checks -----------------------------

def _reference_batched(q, k, v, scale):
    qf, kf, vf = (x.astype(jnp.float32) for x in (q, k, v))
    u = jnp.einsum('bqd,bkd->bqk', qf, kf, precision='highest') / scale
    attn = jax.nn.softmax(u, axis=-1)
    out = 0.2 * jnp.einsum('bqk,bkd->bqd', attn, vf, precision='highest') + 0.8 * qf
    return attn, out


def _check_single(key, Nq, Nk, D):
    kq, kk, kv = jax.random.split(key, 3)
    q = jax.random.normal(kq, (Nq, D), dtype=jnp.float32)
    k = jax.random.normal(kk, (Nk, D), dtype=jnp.float32)
    v = jax.random.normal(kv, (Nk, D), dtype=jnp.float32)
    scale = float(D) ** 0.5
    attn, out = scaled_dot_product_attention(q, k, v, scale)
    jax.block_until_ready((attn, out))
    attn_ref, out_ref = _reference_batched(q[None], k[None], v[None], scale)
    assert attn.shape == (1, Nq, Nk) and out.shape == (Nq, D)
    assert jnp.allclose(attn, attn_ref, atol=2e-3, rtol=2e-3)
    assert jnp.allclose(out, out_ref[0], atol=2e-3, rtol=2e-3)


def _check_batched(key, B, Nq, Nk, D, attn_dtype=None):
    kq, kk, kv = jax.random.split(key, 3)
    q = jax.random.normal(kq, (B, Nq, D), dtype=jnp.float32)
    k = jax.random.normal(kk, (B, Nk, D), dtype=jnp.float32)
    v = jax.random.normal(kv, (B, Nk, D), dtype=jnp.float32)
    scale = float(D) ** 0.5
    attn, out = scaled_dot_product_attention_batched(
        q, k, v, scale, attn_dtype=attn_dtype)
    jax.block_until_ready((attn, out))
    attn_ref, out_ref = _reference_batched(q, k, v, scale)
    assert attn.shape == (B, Nq, Nk) and out.shape == (B, Nq, D)
    atol = 1e-2 if attn_dtype is not None else 2e-3
    assert jnp.allclose(attn.astype(jnp.float32), attn_ref, atol=atol, rtol=atol)
    assert jnp.allclose(out, out_ref, atol=2e-3, rtol=2e-3)


if __name__ == "__main__":
    key = jax.random.PRNGKey(0)
    k0, k1, k2 = jax.random.split(key, 3)

    # Open3DIS call-site shape: a single tiny SDPA (seq=16, hidden=32).
    _check_single(k0, Nq=16, Nk=16, D=32)

    # Many independent tiny SDPAs fused into ONE pallas_call (the real
    # workload); attn written back as bf16 to halve the dominant HBM term.
    _check_batched(k1, B=8, Nq=16, Nk=16, D=32, attn_dtype=jnp.bfloat16)

    # Mid-size single-batch path: >=2 query tiles (v7x 2-TC sharding), ragged
    # last block masked in-kernel, single-buffered resident k/v.
    _check_batched(k2, B=1, Nq=260, Nk=128, D=64)

    print("KERNEL_OK")
</pallas_src>

<mosaic_0001>
module attributes {stable_mosaic.version = 11 : i64} {
  func.func @_sdpa_kernel(%arg0: i32, %arg1: i32, %arg2: memref<1x16x32xf32, #tpu.memory_space<vmem>>, %arg3: memref<1x16x32xf32, #tpu.memory_space<vmem>>, %arg4: memref<1x16x32xf32, #tpu.memory_space<vmem>>, %arg5: memref<1x16x16xf32, #tpu.memory_space<vmem>>, %arg6: memref<1x16x32xf32, #tpu.memory_space<vmem>>) attributes {dimension_semantics = [#tpu.dimension_semantics<parallel>, #tpu.dimension_semantics<parallel>], iteration_bounds = array<i64: 1, 1>, scalar_prefetch = 0 : i64, scratch_operands = 0 : i64, tpu.core_type = #tpu.core_type<tc>, window_params = [{transform_indices = @transform_0, window_bounds = array<i64: 1, 16, 32>}, {pipeline_mode = #tpu.pipeline_mode<synchronous>, transform_indices = @transform_1, window_bounds = array<i64: 1, 16, 32>}, {pipeline_mode = #tpu.pipeline_mode<synchronous>, transform_indices = @transform_2, window_bounds = array<i64: 1, 16, 32>}, {transform_indices = @transform_3, window_bounds = array<i64: 1, 16, 16>}, {transform_indices = @transform_4, window_bounds = array<i64: 1, 16, 32>}]} {
    %c0 = arith.constant 0 : index
    %c0_0 = arith.constant 0 : index
    %c0_1 = arith.constant 0 : index
    %0 = vector.load %arg2[%c0, %c0_0, %c0_1] : memref<1x16x32xf32, #tpu.memory_space<vmem>>, vector<1x16x32xf32>
    %c0_2 = arith.constant 0 : index
    %c0_3 = arith.constant 0 : index
    %c0_4 = arith.constant 0 : index
    %1 = vector.load %arg3[%c0_2, %c0_3, %c0_4] : memref<1x16x32xf32, #tpu.memory_space<vmem>>, vector<1x16x32xf32>
    %c0_5 = arith.constant 0 : index
    %c0_6 = arith.constant 0 : index
    %c0_7 = arith.constant 0 : index
    %2 = vector.load %arg4[%c0_5, %c0_6, %c0_7] : memref<1x16x32xf32, #tpu.memory_space<vmem>>, vector<1x16x32xf32>
    %cst = arith.constant 0.176776692 : f32
    %3 = vector.broadcast %cst : f32 to vector<1x16x32xf32>
    %4 = arith.mulf %0, %3 : vector<1x16x32xf32>
    %cst_8 = arith.constant dense<0.000000e+00> : vector<1x16x16xf32>
    %5 = tpu.matmul %4, %1, %cst_8 {dimension_numbers = #tpu.dot_dimension_numbers<[2], [2], [1], [1], [0, 0, 0, 1, 1, 1], [0], [0]>} : vector<1x16x32xf32>, vector<1x16x32xf32>, vector<1x16x16xf32> -> vector<1x16x16xf32>
    %cst_9 = arith.constant dense<0xFF800000> : vector<1x16xf32>
    %6 = vector.multi_reduction <maximumf>, %5, %cst_9 [2] : vector<1x16x16xf32> to vector<1x16xf32>
    %7 = vector.shape_cast %6 : vector<1x16xf32> to vector<1x16x1xf32>
    %8 = vector.broadcast %7 : vector<1x16x1xf32> to vector<1x16x16xf32>
    %9 = arith.subf %5, %8 : vector<1x16x16xf32>
    %10 = math.exp %9 : vector<1x16x16xf32>
    %cst_10 = arith.constant dense<0.000000e+00> : vector<1x16xf32>
    %11 = vector.multi_reduction <add>, %10, %cst_10 [2] : vector<1x16x16xf32> to vector<1x16xf32>
    %12 = vector.shape_cast %11 : vector<1x16xf32> to vector<1x16x1xf32>
    %13 = tpu.reciprocal %12 : vector<1x16x1xf32> -> vector<1x16x1xf32>
    %14 = vector.broadcast %13 : vector<1x16x1xf32> to vector<1x16x16xf32>
    %15 = arith.mulf %10, %14 : vector<1x16x16xf32>
    %c0_11 = arith.constant 0 : index
    %c0_12 = arith.constant 0 : index
    %c0_13 = arith.constant 0 : index
    %16 = vector.load %arg5[%c0_11, %c0_12, %c0_13] : memref<1x16x16xf32, #tpu.memory_space<vmem>>, vector<1x16x16xf32>
    tpu.vector_store %arg5[%c0_11, %c0_12, %c0_13], %15 {strides = array<i32>} : memref<1x16x16xf32, #tpu.memory_space<vmem>>, vector<1x16x16xf32>,
    %cst_14 = arith.constant dense<0.000000e+00> : vector<1x16x32xf32>
    %17 = tpu.matmul %15, %2, %cst_14 {dimension_numbers = #tpu.dot_dimension_numbers<[2], [1], [1], [2], [0, 0, 0, 1, 1, 2], [0], [0]>} : vector<1x16x16xf32>, vector<1x16x32xf32>, vector<1x16x32xf32> -> vector<1x16x32xf32>
    %cst_15 = arith.constant 2.000000e-01 : f32
    %18 = vector.broadcast %cst_15 : f32 to vector<1x16x32xf32>
    %19 = arith.mulf %18, %17 : vector<1x16x32xf32>
    %cst_16 = arith.constant 8.000000e-01 : f32
    %20 = vector.broadcast %cst_16 : f32 to vector<1x16x32xf32>
    %21 = arith.mulf %20, %0 : vector<1x16x32xf32>
    %22 = arith.addf %19, %21 : vector<1x16x32xf32>
    %c0_17 = arith.constant 0 : index
    %c0_18 = arith.constant 0 : index
    %c0_19 = arith.constant 0 : index
    %23 = vector.load %arg6[%c0_17, %c0_18, %c0_19] : memref<1x16x32xf32, #tpu.memory_space<vmem>>, vector<1x16x32xf32>
    tpu.vector_store %arg6[%c0_17, %c0_18, %c0_19], %22 {strides = array<i32>} : memref<1x16x32xf32, #tpu.memory_space<vmem>>, vector<1x16x32xf32>,
    return
  }
  func.func @transform_0(%arg0: i32, %arg1: i32) -> (i32, i32, i32) {
    %c0_i32 = arith.constant 0 : i32
    %c0_i32_0 = arith.constant 0 : i32
    return %arg0, %arg1, %c0_i32 : i32, i32, i32
  }
  func.func @transform_1(%arg0: i32, %arg1: i32) -> (i32, i32, i32) {
    %c0_i32 = arith.constant 0 : i32
    %c0_i32_0 = arith.constant 0 : i32
    %c0_i32_1 = arith.constant 0 : i32
    return %arg0, %c0_i32, %c0_i32_0 : i32, i32, i32
  }
  func.func @transform_2(%arg0: i32, %arg1: i32) -> (i32, i32, i32) {
    %c0_i32 = arith.constant 0 : i32
    %c0_i32_0 = arith.constant 0 : i32
    %c0_i32_1 = arith.constant 0 : i32
    return %arg0, %c0_i32, %c0_i32_0 : i32, i32, i32
  }
  func.func @transform_3(%arg0: i32, %arg1: i32) -> (i32, i32, i32) {
    %c0_i32 = arith.constant 0 : i32
    %c0_i32_0 = arith.constant 0 : i32
    return %arg0, %arg1, %c0_i32 : i32, i32, i32
  }
  func.func @transform_4(%arg0: i32, %arg1: i32) -> (i32, i32, i32) {
    %c0_i32 = arith.constant 0 : i32
    %c0_i32_0 = arith.constant 0 : i32
    return %arg0, %arg1, %c0_i32 : i32, i32, i32
  }
}

</mosaic_0001>

<llo_original>
// kernel: tpu_custom_call.1
$region0: #{tpu_custom_call.1}
  #allocation0 [shape = 'u32[]', space=smem, size = 0x4, offset = 0x4, fixed_abs, tag = 'smem constant byte address 0x4 - core index']
  #allocation1 [shape = 'u32[144,128]{1,0:T(1,128)}', space=vmem, size = 0x12000, scoped, tag = 'internal scratch']
  %s0 = inlined_call_operand.hbm [shape: f32[1,16,32], index: 0, kind: input, shape index: {}]
  %s1 = inlined_call_operand.hbm [shape: f32[1,16,32], index: 1, kind: input, shape index: {}]
  %s2 = inlined_call_operand.hbm [shape: f32[1,16,32], index: 2, kind: input, shape index: {}]
  %s3 = inlined_call_operand.hbm [shape: f32[1,16,16], index: 3, kind: output, shape index: {0}]
  %s4 = inlined_call_operand.hbm [shape: f32[1,16,32], index: 4, kind: output, shape index: {1}]
  %5 = xla_tuple %s3, %s4
  %s6 = sld [smem:[#allocation0]]
  $region42: #{tpu_custom_call.1} parent=0
    _
  %s8 = ssub.s32 1, %s6
  %s9 = scalar_select 0, %s8, %s6
  $region1: #{tpu_custom_call.1} parent=0
    #allocation2 [shape = 'u8[8192]{0}', space=vmem, size = 0x2000, scoped, tag = 'input window, operand 0, single buffered']
    #allocation3 [shape = 's32[1]{0}', space=sflag, size = 0x4, scoped, tag = 'scoped memory for tpu_custom_call.1']
    #allocation4 [shape = 's32[1]{0}', space=sflag, size = 0x4, scoped, tag = 'scoped memory for tpu_custom_call.1']
    #allocation5 [shape = 'u8[8192]{0}', space=vmem, size = 0x2000, scoped, tag = 'input window, operand 1, single buffered']
    #allocation6 [shape = 's32[1]{0}', space=sflag, size = 0x4, scoped, tag = 'scoped memory for tpu_custom_call.1']
    #allocation7 [shape = 'u8[8192]{0}', space=vmem, size = 0x2000, scoped, tag = 'input window, operand 2, single buffered']
    #allocation8 [shape = 'u8[8192]{0}', space=vmem, size = 0x2000, scoped, tag = 'output window, operand 0, single buffered']
    #allocation9 [shape = 'u8[8192]{0}', space=vmem, size = 0x2000, scoped, tag = 'output window, operand 1, single buffered']
    #allocation10 [shape = 's32[1]{0}', space=sflag, size = 0x4, scoped, tag = 'scoped memory for tpu_custom_call.1']
    %10 = vsyncpa [#allocation3], 0
    %11 = vsyncpa [#allocation6], 0
    %12 = vsyncpa [#allocation4], 0
    %13 = vsyncpa [#allocation10], 0
    // Predicated region
    $region2: #{tpu_custom_call.1} parent=1 // pred_check
      _
    $region3: #{tpu_custom_call.1} parent=1 // pred_check_branch
      %15 = sbr.rel (0) target = $region5
    $region4: #{tpu_custom_call.1} parent=1 // pred_region
      %s17 = ssub.s32 256, 256
      %18 = vsyncadd [#allocation3], %s17
      %s19 = sshll.u32 [#allocation2], 4
      %s20 = int_to_ptr.vmem [resolvable:$true] %s19
      %25 = dma.hbm_to_vmem [thread:$0]  %s0, 256, %s20, [#allocation3], 128, 128, 8
    $region5: #{tpu_custom_call.1} parent=1 // pred_fallthru
      _
    // Predicated region
    $region6: #{tpu_custom_call.1} parent=1 // pred_check
      _
    $region7: #{tpu_custom_call.1} parent=1 // pred_check_branch
      %27 = sbr.rel (0) target = $region9
    $region8: #{tpu_custom_call.1} parent=1 // pred_region
      %s29 = ssub.s32 256, 256
      %30 = vsyncadd [#allocation6], %s29
      %s31 = sshll.u32 [#allocation5], 4
      %s32 = int_to_ptr.vmem [resolvable:$true] %s31
      %37 = dma.hbm_to_vmem [thread:$0]  %s1, 256, %s32, [#allocation6], 128, 128, 8
    $region9: #{tpu_custom_call.1} parent=1 // pred_fallthru
      _
    // Predicated region
    $region10: #{tpu_custom_call.1} parent=1 // pred_check
      _
    $region11: #{tpu_custom_call.1} parent=1 // pred_check_branch
      %39 = sbr.rel (0) target = $region13
    $region12: #{tpu_custom_call.1} parent=1 // pred_region
      %s41 = ssub.s32 256, 256
      %42 = vsyncadd [#allocation6], %s41
      %s43 = sshll.u32 [#allocation7], 4
      %s44 = int_to_ptr.vmem [resolvable:$true] %s43
      %49 = dma.hbm_to_vmem [thread:$0]  %s2, 256, %s44, [#allocation6], 128, 128, 8
    $region13: #{tpu_custom_call.1} parent=1 // pred_fallthru
      _
    // Predicated region
    $region14: #{tpu_custom_call.1} parent=1 // pred_check
      _
    $region15: #{tpu_custom_call.1} parent=1 // pred_check_branch
      %51 = sbr.rel (0) target = $region17
    $region16: #{tpu_custom_call.1} parent=1 // pred_region
      %52 = dma.done [#allocation3], 256
    $region17: #{tpu_custom_call.1} parent=1 // pred_fallthru
      _
    // Predicated region
    $region18: #{tpu_custom_call.1} parent=1 // pred_check
      _
    $region19: #{tpu_custom_call.1} parent=1 // pred_check_branch
      %54 = sbr.rel (0) target = $region21
    $region20: #{tpu_custom_call.1} parent=1 // pred_region
      %55 = dma.done [#allocation6], 256
    $region21: #{tpu_custom_call.1} parent=1 // pred_fallthru
      _
    // Predicated region
    $region22: #{tpu_custom_call.1} parent=1 // pred_check
      _
    $region23: #{tpu_custom_call.1} parent=1 // pred_check_branch
      %57 = sbr.rel (0) target = $region25
    $region24: #{tpu_custom_call.1} parent=1 // pred_region
      %58 = dma.done [#allocation6], 256
    $region25: #{tpu_custom_call.1} parent=1 // pred_fallthru
      _
    %v59 = vld [vmem:[#allocation2] sm:$0xff]
    %v60 = vld [vmem:[#allocation2 + $0x8] sm:$0xff]
    %v61 = vld [vmem:[#allocation5] sm:$0xff]
    %v62 = vld [vmem:[#allocation5 + $0x8] sm:$0xff]
    %v63 = vld [vmem:[#allocation7] sm:$0xff]
    %v64 = vld [vmem:[#allocation7 + $0x8] sm:$0xff]
    %v65 = vmul.f32 %v59, 0.17677669
    %v66 = vmul.f32 %v60, 0.17677669
    %vm67 = vcmask 261120
    %v69 = vsel %vm67, %v65, 0
    %v72 = vsel %vm67, %v66, 0
    %v75 = vsel %vm67, %v61, 0
    %v78 = vsel %vm67, %v62, 0
    %80 = vmatprep.subr.mxu0 0.0
    %81 = vmatpush1.xpose.msra.mxu0 0.0
    %82 = vmatprep.subr.mxu0 0.0
    %83 = vmatpush1.xpose.msra.mxu0 0.0
    %84 = vmatprep.subr.mxu0 0.0
    %85 = vmatpush1.xpose.msra.mxu0 0.0
    %86 = vmatprep.subr.mxu0 0.0
    %87 = vmatpush1.xpose.msra.mxu0 0.0
    %88 = vmatprep.subr.mxu0 0.0
    %89 = vmatpush1.xpose.msra.mxu0 0.0
    %90 = vmatprep.subr.mxu0 0.0
    %91 = vmatpush1.xpose.msra.mxu0 0.0
    %92 = vmatprep.subr.mxu0 0.0
    %93 = vmatpush1.xpose.msra.mxu0 0.0
    %94 = vmatprep.subr.mxu0 0.0
    %95 = vmatpush1.xpose.msra.mxu0 0.0
    %96 = vmatprep.subr.mxu0 0.0
    %97 = vmatpush1.xpose.msra.mxu0 0.0
    %98 = vmatprep.subr.mxu0 0.0
    %99 = vmatpush1.xpose.msra.mxu0 0.0
    %100 = vmatprep.subr.mxu0 0.0
    %101 = vmatpush1.xpose.msra.mxu0 0.0
    %102 = vmatprep.subr.mxu0 0.0
    %103 = vmatpush1.xpose.msra.mxu0 0.0
    %104 = vmatprep.subr.mxu0 0.0
    %105 = vmatpush1.xpose.msra.mxu0 0.0
    %106 = vmatprep.subr.mxu0 0.0
    %107 = vmatpush1.xpose.msra.mxu0 0.0
    %108 = vmatprep.subr.mxu0 0.0
    %109 = vmatpush1.xpose.msra.mxu0 %v78
    %110 = vmatprep.subr.mxu0 0.0
    %111 = vmatpush1.xpose.msra.mxu0 %v75
    %112 = vmatprep.subr.mxu0 0.0
    %113 = vmatpush2.xpose.msra.mxu0 0.0
    %114 = vmatprep.subr.mxu0 0.0
    %115 = vmatpush2.xpose.msra.mxu0 0.0
    %116 = vmatprep.subr.mxu0 0.0
    %117 = vmatpush2.xpose.msra.mxu0 0.0
    %118 = vmatprep.subr.mxu0 0.0
    %119 = vmatpush2.xpose.msra.mxu0 0.0
    %120 = vmatprep.subr.mxu0 0.0
    %121 = vmatpush2.xpose.msra.mxu0 0.0
    %122 = vmatprep.subr.mxu0 0.0
    %123 = vmatpush2.xpose.msra.mxu0 0.0
    %124 = vmatprep.subr.mxu0 0.0
    %125 = vmatpush2.xpose.msra.mxu0 0.0
    %126 = vmatprep.subr.mxu0 0.0
    %127 = vmatpush2.xpose.msra.mxu0 0.0
    %128 = vmatprep.subr.mxu0 0.0
    %129 = vmatpush2.xpose.msra.mxu0 0.0
    %130 = vmatprep.subr.mxu0 0.0
    %131 = vmatpush2.xpose.msra.mxu0 0.0
    %132 = vmatprep.subr.mxu0 0.0
    %133 = vmatpush2.xpose.msra.mxu0 0.0
    %134 = vmatprep.subr.mxu0 0.0
    %135 = vmatpush2.xpose.msra.mxu0 0.0
    %136 = vmatprep.subr.mxu0 0.0
    %137 = vmatpush2.xpose.msra.mxu0 0.0
    %138 = vmatprep.subr.mxu0 0.0
    %139 = vmatpush2.xpose.msra.mxu0 0.0
    %140 = vmatprep.subr.mxu0 0.0
    %141 = vmatpush2.xpose.msra.mxu0 0.0
    %142 = vmatprep.subr.mxu0 0.0
    %143 = vmatpush2.xpose.msra.mxu0 0.0
    %144 = vmatprep.mubr.f32.mxu0 0.0
    %145 = vmatmul.mubr.f32.gmra.mxu0 %v69
    %v146 = vpop.f32.mrf.mxu0
    %v147 = vadd.f32 0.0, %v146
    %v148 = vpop.f32.mrf.mxu0
    %149 = vmatprep.mubr.f32.mxu0 0.0
    %150 = vmatmul.mubr.f32.gmra.mxu0 %v72
    %v151 = vpop.f32.mrf.mxu0
    %v152 = vadd.f32 0.0, %v151
    %v153 = vpop.f32.mrf.mxu0
    %154 = vdwg.mxu0
    %vm155 = vcmask 130048
    %v156 = vsel %vm155, %v147, -inf
    %157 = vmax.xlane.f32.xlu0 %v156
    %v158 = vpop.xlane.xlu0 %157
    %v159 = vsel %vm155, %v152, -inf
    %160 = vmax.xlane.f32.xlu0 %v159
    %v161 = vpop.xlane.xlu0 %160
    %v162 = vsub.f32 %v147, %v158
    %v163 = vsub.f32 %v152, %v161
    %v164 = vmul.f32 %v162, 1.442695
    %v165 = vpow.pop %v164
    %v166 = vmul.f32 %v163, 1.442695
    %v167 = vpow.pop %v166
    %v168 = vsel %vm155, %v165, 0.0
    %169 = vadd.xlane.f32.xlu0 %v168
    %v170 = vpop.xlane.xlu0 %169
    %v171 = vsel %vm155, %v167, 0.0
    %172 = vadd.xlane.f32.xlu0 %v171
    %v173 = vpop.xlane.xlu0 %172
    %v174 = vrcp.pop %v170
    %v175 = vrcp.pop %v173
    %v176 = vmul.f32 %v165, %v174
    %v177 = vmul.f32 %v167, %v175
    %178 = vst.msk [vmem:[#allocation8] sm:$0xff] %vm155, %v176
    %179 = vst.msk [vmem:[#allocation8 + $0x8] sm:$0xff] %vm155, %v177
    %v181 = vsel %vm155, %v176, 0
    %v184 = vsel %vm155, %v177, 0
    %186 = vmatprep.subr.mxu0 0.0
    %187 = vmatpush1.msra.mxu0 0.0
    %188 = vmatprep.subr.mxu0 0.0
    %189 = vmatpush1.msra.mxu0 0.0
    %190 = vmatprep.subr.mxu0 0.0
    %191 = vmatpush1.msra.mxu0 0.0
    %192 = vmatprep.subr.mxu0 0.0
    %193 = vmatpush1.msra.mxu0 0.0
    %194 = vmatprep.subr.mxu0 0.0
    %195 = vmatpush1.msra.mxu0 0.0
    %196 = vmatprep.subr.mxu0 0.0
    %197 = vmatpush1.msra.mxu0 0.0
    %198 = vmatprep.subr.mxu0 0.0
    %199 = vmatpush1.msra.mxu0 0.0
    %200 = vmatprep.subr.mxu0 0.0
    %201 = vmatpush1.msra.mxu0 0.0
    %202 = vmatprep.subr.mxu0 0.0
    %203 = vmatpush1.msra.mxu0 0.0
    %204 = vmatprep.subr.mxu0 0.0
    %205 = vmatpush1.msra.mxu0 0.0
    %206 = vmatprep.subr.mxu0 0.0
    %207 = vmatpush1.msra.mxu0 0.0
    %208 = vmatprep.subr.mxu0 0.0
    %209 = vmatpush1.msra.mxu0 0.0
    %210 = vmatprep.subr.mxu0 0.0
    %211 = vmatpush1.msra.mxu0 0.0
    %212 = vmatprep.subr.mxu0 0.0
    %213 = vmatpush1.msra.mxu0 0.0
    %214 = vmatprep.subr.mxu0 0.0
    %215 = vmatpush1.msra.mxu0 %v64
    %216 = vmatprep.subr.mxu0 0.0
    %217 = vmatpush1.msra.mxu0 %v63
    %218 = vmatprep.subr.mxu0 0.0
    %219 = vmatpush2.msra.mxu0 0.0
    %220 = vmatprep.subr.mxu0 0.0
    %221 = vmatpush2.msra.mxu0 0.0
    %222 = vmatprep.subr.mxu0 0.0
    %223 = vmatpush2.msra.mxu0 0.0
    %224 = vmatprep.subr.mxu0 0.0
    %225 = vmatpush2.msra.mxu0 0.0
    %226 = vmatprep.subr.mxu0 0.0
    %227 = vmatpush2.msra.mxu0 0.0
    %228 = vmatprep.subr.mxu0 0.0
    %229 = vmatpush2.msra.mxu0 0.0
    %230 = vmatprep.subr.mxu0 0.0
    %231 = vmatpush2.msra.mxu0 0.0
    %232 = vmatprep.subr.mxu0 0.0
    %233 = vmatpush2.msra.mxu0 0.0
    %234 = vmatprep.subr.mxu0 0.0
    %235 = vmatpush2.msra.mxu0 0.0
    %236 = vmatprep.subr.mxu0 0.0
    %237 = vmatpush2.msra.mxu0 0.0
    %238 = vmatprep.subr.mxu0 0.0
    %239 = vmatpush2.msra.mxu0 0.0
    %240 = vmatprep.subr.mxu0 0.0
    %241 = vmatpush2.msra.mxu0 0.0
    %242 = vmatprep.subr.mxu0 0.0
    %243 = vmatpush2.msra.mxu0 0.0
    %244 = vmatprep.subr.mxu0 0.0
    %245 = vmatpush2.msra.mxu0 0.0
    %246 = vmatprep.subr.mxu0 0.0
    %247 = vmatpush2.msra.mxu0 0.0
    %248 = vmatprep.subr.mxu0 0.0
    %249 = vmatpush2.msra.mxu0 0.0
    %250 = vmatprep.mubr.f32.mxu0 0.0
    %251 = vmatmul.mubr.f32.gmra.mxu0 %v181
    %v252 = vpop.f32.mrf.mxu0
    %v253 = vadd.f32 0.0, %v252
    %v254 = vpop.f32.mrf.mxu0
    %255 = vmatprep.mubr.f32.mxu0 0.0
    %256 = vmatmul.mubr.f32.gmra.mxu0 %v184
    %v257 = vpop.f32.mrf.mxu0
    %v258 = vadd.f32 0.0, %v257
    %v259 = vpop.f32.mrf.mxu0
    %260 = vdwg.mxu0
    %v261 = vmul.f32 %v253, 0.2
    %v262 = vmul.f32 %v258, 0.2
    %v263 = vmul.f32 %v59, 0.8
    %v264 = vmul.f32 %v60, 0.8
    %v265 = vadd.f32 %v261, %v263
    %v266 = vadd.f32 %v262, %v264
    %267 = vst.msk [vmem:[#allocation9] sm:$0xff] %vm67, %v265
    %268 = vst.msk [vmem:[#allocation9 + $0x8] sm:$0xff] %vm67, %v266
    // Predicated region
    $region26: #{tpu_custom_call.1} parent=1 // pred_check
      _
    $region27: #{tpu_custom_call.1} parent=1 // pred_check_branch
      %270 = sbr.rel (0) target = $region29
    $region28: #{tpu_custom_call.1} parent=1 // pred_region
      %s272 = ssub.s32 256, 256
      %273 = vsyncadd [#allocation4], %s272
      %s274 = sshll.u32 [#allocation8], 4
      %s275 = int_to_ptr.vmem [resolvable:$true] %s274
      %280 = dma.vmem_to_hbm [thread:$0]  %s275, 256, %s3, [#allocation4], 128, 128, 8
    $region29: #{tpu_custom_call.1} parent=1 // pred_fallthru
      _
    // Predicated region
    $region30: #{tpu_custom_call.1} parent=1 // pred_check
      _
    $region31: #{tpu_custom_call.1} parent=1 // pred_check_branch
      %282 = sbr.rel (0) target = $region33
    $region32: #{tpu_custom_call.1} parent=1 // pred_region
      %s284 = ssub.s32 256, 256
      %285 = vsyncadd [#allocation10], %s284
      %s286 = sshll.u32 [#allocation9], 4
      %s287 = int_to_ptr.vmem [resolvable:$true] %s286
      %292 = dma.vmem_to_hbm [thread:$0]  %s287, 256, %s4, [#allocation10], 128, 128, 8
    $region33: #{tpu_custom_call.1} parent=1 // pred_fallthru
      _
    // Predicated region
    $region34: #{tpu_custom_call.1} parent=1 // pred_check
      _
    $region35: #{tpu_custom_call.1} parent=1 // pred_check_branch
      %294 = sbr.rel (0) target = $region37
    $region36: #{tpu_custom_call.1} parent=1 // pred_region
      %295 = dma.done [#allocation4], 256
    $region37: #{tpu_custom_call.1} parent=1 // pred_fallthru
      _
    // Predicated region
    $region38: #{tpu_custom_call.1} parent=1 // pred_check
      _
    $region39: #{tpu_custom_call.1} parent=1 // pred_check_branch
      %297 = sbr.rel (0) target = $region41
    $region40: #{tpu_custom_call.1} parent=1 // pred_region
      %298 = dma.done [#allocation10], 256
    $region41: #{tpu_custom_call.1} parent=1 // pred_fallthru
      _
    %299 = vsyncpa [#allocation3], 1
    %300 = vsyncpa [#allocation6], 1
    %301 = vsyncpa [#allocation4], 1
    %302 = vsyncpa [#allocation10], 1

</llo_original>
